<compile_context>
chip_gen: v7x
topology: tpu7x:2x2x1
jax: 0.10.0
libtpu: 0.0.40
codegen_flags: <defaults>
</compile_context>

<pallas_src>
import math

import jax
import jax.numpy as jnp
from jax import lax
from jax.experimental import pallas as pl
from jax.experimental.pallas import tpu as pltpu

SCORE_MASK_VALUE = -1e20


# --------------------------------------------------------------------------- #
# Tiled matmul kernel (memory_layer only): (M, K) @ (K, N), f32 accumulation.
# --------------------------------------------------------------------------- #
def _matmul_kernel(x_ref, w_ref, o_ref, acc_ref):
    @pl.when(pl.program_id(2) == 0)
    def _init():
        acc_ref[...] = jnp.zeros_like(acc_ref)

    acc_ref[...] += jnp.dot(x_ref[...], w_ref[...],
                            preferred_element_type=jnp.float32)

    @pl.when(pl.program_id(2) == pl.num_programs(2) - 1)
    def _finalize():
        o_ref[...] = acc_ref[...].astype(o_ref.dtype)


def _linear_2d(x2, w_kn, *, tm_pref=512, tn_pref=256, tk_pref=512):
    """y = x2 @ w_kn with M/N/K tiling for the MXU (no bias, no per-call pads)."""
    M, K = x2.shape
    K2, N = w_kn.shape
    assert K == K2, (K, K2)

    # K tiling without activation padding: pick tk that divides K, else full K.
    if K <= tk_pref:
        tk = K
    else:
        tk = K
        for cand in (512, 384, 256, 128):
            if cand <= tk_pref and K % cand == 0:
                tk = cand
                break

    # Row tile: large (512) when M is large; ragged last M tile is fine (OOB
    # rows are never written back).
    tm = M if M <= tm_pref else tm_pref

    # N tiling: weights are pre-padded to a multiple of 128 at init, so N is
    # lane-dense.  Prefer 256-wide tiles for the 256x256 MXUs (v6e/v7x); 128
    # otherwise.  If N is not a multiple of 128 (generic fallback) use the full
    # dim as a single (masked) block.
    if N % 128 == 0:
        if N <= tn_pref:
            tn = N
        elif N % tn_pref == 0:
            tn = tn_pref
        else:
            tn = 128
    else:
        tn = N

    grid = (pl.cdiv(M, tm), pl.cdiv(N, tn), pl.cdiv(K, tk))
    cost = pl.CostEstimate(
        flops=2 * M * K * N,
        transcendentals=0,
        bytes_accessed=4 * (M * K + K * N + M * N),
    )
    return pl.pallas_call(
        _matmul_kernel,
        out_shape=jax.ShapeDtypeStruct((M, N), x2.dtype),
        grid_spec=pltpu.PrefetchScalarGridSpec(
            num_scalar_prefetch=0,
            grid=grid,
            in_specs=[
                pl.BlockSpec((tm, tk), lambda i, j, k: (i, k)),
                pl.BlockSpec((tk, tn), lambda i, j, k: (k, j)),
            ],
            out_specs=pl.BlockSpec((tm, tn), lambda i, j, k: (i, j)),
            scratch_shapes=[pltpu.VMEM((tm, tn), jnp.float32)],
        ),
        compiler_params=pltpu.CompilerParams(
            dimension_semantics=("parallel", "parallel", "arbitrary"),
            vmem_limit_bytes=32 * 1024 * 1024,
        ),
        cost_estimate=cost,
    )(x2, w_kn)


def linear_pallas(x, w_in_out):
    """y = x @ w_in_out.  Weight stored pre-transposed (in_dim, out_dim)."""
    in_dim, out_dim = w_in_out.shape
    lead = x.shape[:-1]
    m = int(math.prod(lead)) if lead else 1
    x2 = x.reshape(m, in_dim)
    out = _linear_2d(x2, w_in_out.astype(x.dtype))
    return out.reshape(*lead, out_dim)


# --------------------------------------------------------------------------- #
# Fused forward-attention kernel: query proj + folded location proj + energies
# + masking + forward bias + softmax + context, one grid step per batch block.
# --------------------------------------------------------------------------- #
def _attention_kernel(q_ref, qw_ref, patch_ref, locw_ref, pm_ref, mem_ref,
                      v_ref, mask_ref, la_ref, ctx_ref, aw_ref, la_new_ref):
    f32 = jnp.float32
    neg = jnp.float32(SCORE_MASK_VALUE)
    nb, t, p = patch_ref.shape
    d = qw_ref.shape[1]

    # processed_query = query @ W_q  (W_q resident in VMEM).
    pq = jnp.dot(q_ref[...].astype(f32), qw_ref[...].astype(f32),
                 preferred_element_type=f32)                           # (NB, D)

    # Folded location conv+dense: (NB*T, 2*Kk) @ (2*Kk, D) on the MXU.
    patches = patch_ref[...].astype(f32).reshape(nb * t, p)
    paw = jnp.dot(patches, locw_ref[...].astype(f32),
                  preferred_element_type=f32).reshape(nb, t, d)        # (NB, T, D)

    # energies = v . tanh(pq + paw + pm): VPU multiply + lane reduce (no 1-row
    # MXU matvec, no (T, D) XLU transpose).
    h = jnp.tanh(paw + pm_ref[...].astype(f32) + pq[:, None, :])       # (NB, T, D)
    e = jnp.sum(h * v_ref[...].astype(f32), axis=-1)                   # (NB, T)
    e = jnp.where(mask_ref[...] > 0.5, neg, e)

    # forward-attention bias: logsumexp over {log_alpha, shift-by-1(log_alpha)}.
    # The shift is computed in-kernel: lane roll (XLU, free slot) + iota select.
    la = la_ref[...].astype(f32)                                       # (NB, T)
    col = lax.broadcasted_iota(jnp.int32, la.shape, 1)
    la_prev = jnp.where(col == 0, neg, pltpu.roll(la, shift=1, axis=1))
    m2 = jnp.maximum(la, la_prev)
    biased = m2 + jnp.log(jnp.exp(la - m2) + jnp.exp(la_prev - m2))
    la_new = biased + e                                                # (NB, T)

    # softmax over time.
    mx = jnp.max(la_new, axis=-1, keepdims=True)
    pexp = jnp.exp(la_new - mx)
    aw = pexp / jnp.sum(pexp, axis=-1, keepdims=True)                  # (NB, T)

    # attention context: (NB, 1, T) @ (NB, T, E) batched matmul.
    ctx = jnp.einsum("bqt,bte->bqe", aw[:, None, :], mem_ref[...].astype(f32),
                     preferred_element_type=f32)[:, 0, :]              # (NB, E)

    ctx_ref[...] = ctx.astype(ctx_ref.dtype)
    aw_ref[...] = aw.astype(aw_ref.dtype)
    la_new_ref[...] = la_new.astype(la_new_ref.dtype)


def _attention_core(query, patches, processed_memory, memory,
                    query_w, loc_w, v_w, mask_f, log_alpha):
    B, T, E = memory.shape
    R = query.shape[-1]
    P, D = loc_w.shape

    # Batch blocking: amortize the per-grid-step cost.  NB == B when B <= 8
    # (full-dim blocks), else 8 (keeps the sublane divisibility rule and a
    # modest VMEM footprint even under v7x's 64 MiB).
    NB = B if B <= 8 else 8
    grid = (pl.cdiv(B, NB),)

    out_shape = (
        jax.ShapeDtypeStruct((B, E), memory.dtype),   # attention_context
        jax.ShapeDtypeStruct((B, T), jnp.float32),    # attention_weights
        jax.ShapeDtypeStruct((B, T), jnp.float32),    # log_alpha_new
    )
    cost = pl.CostEstimate(
        flops=int(B * (2 * R * D + T * (2 * P * D + 4 * D + 2 * E + 12))),
        transcendentals=int(B * T * (D + 4)),
        bytes_accessed=int(4 * (B * (R + T * (P + D + E + 3) + E)
                                + R * D + P * D + D)),
    )
    return pl.pallas_call(
        _attention_kernel,
        out_shape=out_shape,
        grid_spec=pltpu.PrefetchScalarGridSpec(
            num_scalar_prefetch=0,
            grid=grid,
            in_specs=[
                pl.BlockSpec((NB, R), lambda b: (b, 0)),        # query
                pl.BlockSpec((R, D), lambda b: (0, 0)),         # W_q (resident)
                pl.BlockSpec((NB, T, P), lambda b: (b, 0, 0)),  # im2col patches
                pl.BlockSpec((P, D), lambda b: (0, 0)),         # folded W_loc
                pl.BlockSpec((NB, T, D), lambda b: (b, 0, 0)),  # processed memory
                pl.BlockSpec((NB, T, E), lambda b: (b, 0, 0)),  # memory
                pl.BlockSpec((1, D), lambda b: (0, 0)),         # v (resident)
                pl.BlockSpec((NB, T), lambda b: (b, 0)),        # mask (0/1 float)
                pl.BlockSpec((NB, T), lambda b: (b, 0)),        # log_alpha
            ],
            out_specs=[
                pl.BlockSpec((NB, E), lambda b: (b, 0)),
                pl.BlockSpec((NB, T), lambda b: (b, 0)),
                pl.BlockSpec((NB, T), lambda b: (b, 0)),
            ],
        ),
        compiler_params=pltpu.CompilerParams(
            dimension_semantics=("parallel",),
            vmem_limit_bytes=32 * 1024 * 1024,
        ),
        cost_estimate=cost,
    )(query, query_w, patches, loc_w, processed_memory, memory,
      v_w, mask_f, log_alpha)


# --------------------------------------------------------------------------- #
# Parameters + module-level forward.
# --------------------------------------------------------------------------- #
def init_forward_attention_v2_params(key, attention_rnn_dim, embedding_dim,
                                     attention_dim, attention_location_n_filters,
                                     attention_location_kernel_size,
                                     dtype=jnp.float32):
    gain_tanh = 5.0 / 3.0
    gain_linear = 1.0
    Fn = attention_location_n_filters
    Kk = attention_location_kernel_size
    D = attention_dim
    kq, km, kv, kc, kd = jax.random.split(key, 5)

    def xavier(k, shape, fan_in, fan_out, gain):
        limit = gain * math.sqrt(6.0 / (fan_in + fan_out))
        return jax.random.uniform(k, shape, dtype, -limit, limit)

    # Linear weights stored pre-transposed (in_dim, out_dim).
    query_w = xavier(kq, (attention_rnn_dim, D), attention_rnn_dim, D, gain_tanh)
    memory_w = xavier(km, (embedding_dim, D), embedding_dim, D, gain_tanh)
    v_w = xavier(kv, (1, D), D, 1, gain_linear)
    loc_conv_w = xavier(kc, (Fn, 2, Kk), 2 * Kk, Fn * Kk, gain_linear)
    loc_dense_w = xavier(kd, (Fn, D), Fn, D, gain_tanh)

    # Fold conv(im2col) + dense into ONE weight (exact: bias=False, no
    # nonlinearity between them):  (2*Kk, F) @ (F, D) -> (2*Kk, D).
    loc_w = loc_conv_w.reshape(Fn, 2 * Kk).T @ loc_dense_w

    # Pre-pad memory_layer's output columns to a multiple of 128 ONCE at init
    # (lane-dense unmasked stores, no per-call pad copy on the critical path).
    d_pad = (-D) % 128
    memory_w_p = jnp.pad(memory_w, ((0, 0), (0, d_pad))) if d_pad else memory_w

    return {
        "query_w": query_w,
        "memory_w": memory_w,          # unpadded (reference / export)
        "memory_w_p": memory_w_p,      # lane-padded, used by the kernel
        "v_w": v_w,
        "loc_conv_w": loc_conv_w,
        "loc_dense_w": loc_dense_w,
        "loc_w": loc_w,                # folded conv+dense weight
    }


def process_memory(params, memory):
    """processed_memory = memory_layer(memory) (precomputed, as in Tacotron use)."""
    D = params["v_w"].shape[1]
    pm = linear_pallas(memory, params["memory_w_p"])
    return pm[..., :D]


def _im2col_patches(attention_weights_cat, kernel_size):
    """(B, 2, T) -> (B, T, 2*Kk) im2col patches for the location conv."""
    B, C, T = attention_weights_cat.shape
    pad = (kernel_size - 1) // 2
    xp = jnp.pad(attention_weights_cat, ((0, 0), (0, 0), (pad, pad)))
    idx = jnp.arange(T)[:, None] + jnp.arange(kernel_size)[None, :]     # (T, Kk)
    patches = xp[:, :, idx]                                             # (B, C, T, Kk)
    return jnp.transpose(patches, (0, 2, 1, 3)).reshape(B, T, C * kernel_size)


def forward_attention_v2(params, attention_hidden_state, memory, processed_memory,
                         attention_weights_cat, mask, log_alpha):
    B, T, E = memory.shape
    Kk = params["loc_conv_w"].shape[-1]

    # Index plumbing only; all projections happen inside the fused kernel.
    patches = _im2col_patches(attention_weights_cat, Kk).astype(jnp.float32)
    mask_f = (jnp.zeros((B, T), jnp.float32) if mask is None
              else mask.astype(jnp.float32))

    ctx, attn_w, log_alpha_new = _attention_core(
        attention_hidden_state, patches, processed_memory, memory,
        params["query_w"], params["loc_w"], params["v_w"],
        mask_f, log_alpha.astype(jnp.float32))
    return ctx, attn_w, log_alpha_new


# --------------------------------------------------------------------------- #
# Pure-JAX reference (mirrors the PyTorch module semantics, unfolded weights).
# --------------------------------------------------------------------------- #
def _reference_forward(params, query, memory, processed_memory,
                       attention_weights_cat, mask, log_alpha):
    pq = query @ params["query_w"]                                      # (B, D)
    B, _, T = attention_weights_cat.shape
    _, _, Kk = params["loc_conv_w"].shape
    pad = (Kk - 1) // 2
    xp = jnp.pad(attention_weights_cat, ((0, 0), (0, 0), (pad, pad)))
    idx = jnp.arange(T)[:, None] + jnp.arange(Kk)[None, :]
    patches = xp[:, :, idx]                                             # (B, 2, T, Kk)
    conv = jnp.einsum("bctk,fck->btf", patches, params["loc_conv_w"])
    paw = conv @ params["loc_dense_w"]                                  # (B, T, D)
    h = jnp.tanh(pq[:, None, :] + paw + processed_memory)
    e = jnp.einsum("btd,d->bt", h, params["v_w"][0])
    if mask is not None:
        e = jnp.where(mask, SCORE_MASK_VALUE, e)
    la_prev = jnp.pad(log_alpha[:, : T - 1], ((0, 0), (1, 0)),
                      constant_values=SCORE_MASK_VALUE)
    biased = jnp.logaddexp(log_alpha, la_prev)
    la_new = biased + e
    aw = jax.nn.softmax(la_new, axis=1)
    ctx = jnp.einsum("bt,bte->be", aw, memory)
    return ctx, aw, la_new


if __name__ == "__main__":
    key = jax.random.PRNGKey(0)
    B, T = 2, 8
    attention_rnn_dim = 32
    embedding_dim = 32
    attention_dim = 32
    attention_location_n_filters = 8
    attention_location_kernel_size = 5

    kp, kq, km, kc, ka = jax.random.split(key, 5)
    params = init_forward_attention_v2_params(
        kp, attention_rnn_dim, embedding_dim, attention_dim,
        attention_location_n_filters, attention_location_kernel_size)

    attention_hidden_state = jax.random.normal(kq, (B, attention_rnn_dim), jnp.float32)
    memory = jax.random.normal(km, (B, T, embedding_dim), jnp.float32)
    attention_weights_cat = jax.nn.softmax(
        jax.random.normal(kc, (B, 2, T), jnp.float32), axis=-1)
    log_alpha = jax.nn.log_softmax(
        jax.random.normal(ka, (B, T), jnp.float32), axis=-1)
    lengths = jnp.array([T, T - 3])
    mask = jnp.arange(T)[None, :] >= lengths[:, None]                   # True = padded

    # processed_memory comes from the memory_layer (tiled Pallas matmul kernel).
    processed_memory = process_memory(params, memory)

    ctx, attn_w, log_alpha_new = forward_attention_v2(
        params, attention_hidden_state, memory, processed_memory,
        attention_weights_cat, mask, log_alpha)
    ctx, attn_w, log_alpha_new, processed_memory = jax.block_until_ready(
        (ctx, attn_w, log_alpha_new, processed_memory))

    # Reference checks (full-precision matmuls so the reference matches the
    # kernel's f32 MXU accumulation).
    with jax.default_matmul_precision("highest"):
        pm_ref = memory @ params["memory_w"]
        ctx_r, aw_r, la_r = _reference_forward(
            params, attention_hidden_state, memory, processed_memory,
            attention_weights_cat, mask, log_alpha)
        ctx_r, aw_r, la_r, pm_ref = jax.block_until_ready((ctx_r, aw_r, la_r, pm_ref))

    assert ctx.shape == (B, embedding_dim)
    assert attn_w.shape == (B, T)
    assert log_alpha_new.shape == (B, T)
    assert jnp.allclose(processed_memory, pm_ref, atol=1e-3, rtol=1e-3)
    assert jnp.allclose(ctx, ctx_r, atol=1e-3, rtol=1e-3)
    assert jnp.allclose(attn_w, aw_r, atol=1e-3, rtol=1e-3)
    assert jnp.allclose(log_alpha_new, la_r, atol=1e-3, rtol=1e-3)

    print("KERNEL_OK")
</pallas_src>

<mosaic_0001>
module attributes {stable_mosaic.version = 11 : i64} {
  func.func @_matmul_kernel(%arg0: i32, %arg1: i32, %arg2: i32, %arg3: memref<16x32xf32, #tpu.memory_space<vmem>>, %arg4: memref<32x128xf32, #tpu.memory_space<vmem>>, %arg5: memref<16x128xf32, #tpu.memory_space<vmem>>, %arg6: memref<16x128xf32, #tpu.memory_space<vmem>>) attributes {dimension_semantics = [#tpu.dimension_semantics<parallel>, #tpu.dimension_semantics<parallel>, #tpu.dimension_semantics<arbitrary>], iteration_bounds = array<i64: 1, 1, 1>, scalar_prefetch = 0 : i64, scratch_operands = 1 : i64, tpu.core_type = #tpu.core_type<tc>, window_params = [{transform_indices = @transform_0, window_bounds = array<i64: 16, 32>}, {transform_indices = @transform_1, window_bounds = array<i64: 32, 128>}, {transform_indices = @transform_2, window_bounds = array<i64: 16, 128>}]} {
    %c0_i32 = arith.constant 0 : i32
    %0 = arith.cmpi eq, %arg2, %c0_i32 : i32
    %1 = arith.extui %0 : i1 to i32
    %c0_i32_0 = arith.constant 0 : i32
    %2 = arith.cmpi ne, %1, %c0_i32_0 : i32
    scf.if %2 {
      %cst_10 = arith.constant 0.000000e+00 : f32
      %12 = vector.broadcast %cst_10 : f32 to vector<16x128xf32>
      %c0_11 = arith.constant 0 : index
      %c0_12 = arith.constant 0 : index
      %13 = vector.load %arg6[%c0_11, %c0_12] : memref<16x128xf32, #tpu.memory_space<vmem>>, vector<16x128xf32>
      tpu.vector_store %arg6[%c0_11, %c0_12], %12 {strides = array<i32>} : memref<16x128xf32, #tpu.memory_space<vmem>>, vector<16x128xf32>,
    } else {
    }
    %c0 = arith.constant 0 : index
    %c0_1 = arith.constant 0 : index
    %3 = vector.load %arg6[%c0, %c0_1] : memref<16x128xf32, #tpu.memory_space<vmem>>, vector<16x128xf32>
    %c0_2 = arith.constant 0 : index
    %c0_3 = arith.constant 0 : index
    %4 = vector.load %arg3[%c0_2, %c0_3] : memref<16x32xf32, #tpu.memory_space<vmem>>, vector<16x32xf32>
    %c0_4 = arith.constant 0 : index
    %c0_5 = arith.constant 0 : index
    %5 = vector.load %arg4[%c0_4, %c0_5] : memref<32x128xf32, #tpu.memory_space<vmem>>, vector<32x128xf32>
    %cst = arith.constant dense<0.000000e+00> : vector<16x128xf32>
    %6 = tpu.matmul %4, %5, %cst {dimension_numbers = #tpu.dot_dimension_numbers<[1], [0], [0], [1], [0, 0, 1, 1], [], []>} : vector<16x32xf32>, vector<32x128xf32>, vector<16x128xf32> -> vector<16x128xf32>
    %7 = arith.addf %3, %6 : vector<16x128xf32>
    %c0_6 = arith.constant 0 : index
    %c0_7 = arith.constant 0 : index
    %8 = vector.load %arg6[%c0_6, %c0_7] : memref<16x128xf32, #tpu.memory_space<vmem>>, vector<16x128xf32>
    tpu.vector_store %arg6[%c0_6, %c0_7], %7 {strides = array<i32>} : memref<16x128xf32, #tpu.memory_space<vmem>>, vector<16x128xf32>,
    %c0_i32_8 = arith.constant 0 : i32
    %9 = arith.cmpi eq, %arg2, %c0_i32_8 : i32
    %10 = arith.extui %9 : i1 to i32
    %c0_i32_9 = arith.constant 0 : i32
    %11 = arith.cmpi ne, %10, %c0_i32_9 : i32
    scf.if %11 {
      %c0_10 = arith.constant 0 : index
      %c0_11 = arith.constant 0 : index
      %12 = vector.load %arg6[%c0_10, %c0_11] : memref<16x128xf32, #tpu.memory_space<vmem>>, vector<16x128xf32>
      %c0_12 = arith.constant 0 : index
      %c0_13 = arith.constant 0 : index
      %13 = vector.load %arg5[%c0_12, %c0_13] : memref<16x128xf32, #tpu.memory_space<vmem>>, vector<16x128xf32>
      tpu.vector_store %arg5[%c0_12, %c0_13], %12 {strides = array<i32>} : memref<16x128xf32, #tpu.memory_space<vmem>>, vector<16x128xf32>,
    } else {
    }
    return
  }
  func.func @transform_0(%arg0: i32, %arg1: i32, %arg2: i32) -> (i32, i32) {
    %c0_i32 = arith.constant 0 : i32
    return %arg0, %arg2 : i32, i32
  }
  func.func @transform_1(%arg0: i32, %arg1: i32, %arg2: i32) -> (i32, i32) {
    %c0_i32 = arith.constant 0 : i32
    return %arg2, %arg1 : i32, i32
  }
  func.func @transform_2(%arg0: i32, %arg1: i32, %arg2: i32) -> (i32, i32) {
    %c0_i32 = arith.constant 0 : i32
    return %arg0, %arg1 : i32, i32
  }
}

</mosaic_0001>

<llo_original>
// kernel: tpu_custom_call.1
$region0: #{tpu_custom_call.1}
  #allocation0 [shape = 'u32[]', space=smem, size = 0x4, offset = 0x4, fixed_abs, tag = 'smem constant byte address 0x4 - core index']
  #allocation1 [shape = 'u32[144,128]{1,0:T(1,128)}', space=vmem, size = 0x12000, scoped, tag = 'internal scratch']
  #allocation2 [shape = 'f32[16,128]{1,0:T(8,128)}', space=vmem, size = 0x2000, scoped, tag = 'scratch operand']
  %s0 = inlined_call_operand.hbm [shape: f32[16,32], index: 0, kind: input, shape index: {}]
  %s1 = inlined_call_operand.hbm [shape: f32[32,128], index: 1, kind: input, shape index: {}]
  %s2 = inlined_call_operand.hbm [shape: f32[16,128], index: 2, kind: output, shape index: {}]
  %s3 = sld [smem:[#allocation0]]
  $region34: #{tpu_custom_call.1} parent=0
    _
  %s5 = ssub.s32 1, %s3
  %s6 = scalar_select 0, %s5, %s3
  $region1: #{tpu_custom_call.1} parent=0
    #allocation3 [shape = 'u8[8192]{0}', space=vmem, size = 0x2000, scoped, tag = 'input window, operand 0, single buffered']
    #allocation4 [shape = 's32[1]{0}', space=sflag, size = 0x4, scoped, tag = 'scoped memory for tpu_custom_call.1']
    #allocation5 [shape = 's32[1]{0}', space=sflag, size = 0x4, scoped, tag = 'scoped memory for tpu_custom_call.1']
    #allocation6 [shape = 'u8[16384]{0}', space=vmem, size = 0x4000, scoped, tag = 'input window, operand 1, single buffered']
    #allocation7 [shape = 's32[1]{0}', space=sflag, size = 0x4, scoped, tag = 'scoped memory for tpu_custom_call.1']
    #allocation8 [shape = 'u8[8192]{0}', space=vmem, size = 0x2000, scoped, tag = 'output window, operand 0, single buffered']
    %7 = vsyncpa [#allocation4], 0
    %8 = vsyncpa [#allocation7], 0
    %9 = vsyncpa [#allocation5], 0
    // Predicated region
    $region2: #{tpu_custom_call.1} parent=1 // pred_check
      _
    $region3: #{tpu_custom_call.1} parent=1 // pred_check_branch
      %11 = sbr.rel (0) target = $region5
    $region4: #{tpu_custom_call.1} parent=1 // pred_region
      %s13 = ssub.s32 256, 256
      %14 = vsyncadd [#allocation4], %s13
      %s15 = sshll.u32 [#allocation3], 4
      %s16 = int_to_ptr.vmem [resolvable:$true] %s15
      %21 = dma.hbm_to_vmem [thread:$0]  %s0, 256, %s16, [#allocation4], 128, 128, 8
    $region5: #{tpu_custom_call.1} parent=1 // pred_fallthru
      _
    // Predicated region
    $region6: #{tpu_custom_call.1} parent=1 // pred_check
      _
    $region7: #{tpu_custom_call.1} parent=1 // pred_check_branch
      %23 = sbr.rel (0) target = $region9
    $region8: #{tpu_custom_call.1} parent=1 // pred_region
      %s25 = ssub.s32 512, 512
      %26 = vsyncadd [#allocation7], %s25
      %s27 = sshll.u32 [#allocation6], 4
      %s28 = int_to_ptr.vmem [resolvable:$true] %s27
      %33 = dma.hbm_to_vmem [thread:$0]  %s1, 512, %s28, [#allocation7], 128, 128, 8
    $region9: #{tpu_custom_call.1} parent=1 // pred_fallthru
      _
    // Predicated region
    $region10: #{tpu_custom_call.1} parent=1 // pred_check
      _
    $region11: #{tpu_custom_call.1} parent=1 // pred_check_branch
      %35 = sbr.rel (0) target = $region13
    $region12: #{tpu_custom_call.1} parent=1 // pred_region
      %36 = dma.done [#allocation4], 256
    $region13: #{tpu_custom_call.1} parent=1 // pred_fallthru
      _
    // Predicated region
    $region14: #{tpu_custom_call.1} parent=1 // pred_check
      _
    $region15: #{tpu_custom_call.1} parent=1 // pred_check_branch
      %38 = sbr.rel (0) target = $region17
    $region16: #{tpu_custom_call.1} parent=1 // pred_region
      %39 = dma.done [#allocation7], 512
    $region17: #{tpu_custom_call.1} parent=1 // pred_fallthru
      _
    %p40 = scmp.eq.s32.totalorder 0, 0
    // Predicated region
    $region18: #{tpu_custom_call.1} parent=1 // pred_check
      %p41 = pneg %p40
    $region19: #{tpu_custom_call.1} parent=1 // pred_check_branch
      %43 = sbr.rel (%p41) target = $region21
    $region20: #{tpu_custom_call.1} parent=1 // pred_region
      %44 = vst [vmem:[#allocation2] sm:$0xff] 0.0
      %45 = vst [vmem:[#allocation2 + $0x8] sm:$0xff] 0.0
    $region21: #{tpu_custom_call.1} parent=1 // pred_fallthru
      _
    %v46 = vld [vmem:[#allocation2] sm:$0xff]
    %v47 = vld [vmem:[#allocation2 + $0x8] sm:$0xff]
    %v48 = vld [vmem:[#allocation3] sm:$0xff]
    %v49 = vld [vmem:[#allocation3 + $0x8] sm:$0xff]
    %v50 = vld [vmem:[#allocation6] sm:$0xff]
    %v51 = vld [vmem:[#allocation6 + $0x8] sm:$0xff]
    %v52 = vld [vmem:[#allocation6 + $0x10] sm:$0xff]
    %v53 = vld [vmem:[#allocation6 + $0x18] sm:$0xff]
    %vm54 = vcmask 261120
    %v56 = vsel %vm54, %v48, 0
    %v59 = vsel %vm54, %v49, 0
    %61 = vmatprep.subr.mxu0 0.0
    %62 = vmatpush1.msra.mxu0 %v50
    %63 = vmatprep.subr.mxu0 0.0
    %64 = vmatpush1.msra.mxu0 %v51
    %65 = vmatprep.subr.mxu0 0.0
    %66 = vmatpush1.msra.mxu0 %v52
    %67 = vmatprep.subr.mxu0 0.0
    %68 = vmatpush1.msra.mxu0 %v53
    %69 = vmatprep.subr.mxu0 0.0
    %70 = vmatpush1.msra.mxu0 0.0
    %71 = vmatprep.subr.mxu0 0.0
    %72 = vmatpush1.msra.mxu0 0.0
    %73 = vmatprep.subr.mxu0 0.0
    %74 = vmatpush1.msra.mxu0 0.0
    %75 = vmatprep.subr.mxu0 0.0
    %76 = vmatpush1.msra.mxu0 0.0
    %77 = vmatprep.subr.mxu0 0.0
    %78 = vmatpush1.msra.mxu0 0.0
    %79 = vmatprep.subr.mxu0 0.0
    %80 = vmatpush1.msra.mxu0 0.0
    %81 = vmatprep.subr.mxu0 0.0
    %82 = vmatpush1.msra.mxu0 0.0
    %83 = vmatprep.subr.mxu0 0.0
    %84 = vmatpush1.msra.mxu0 0.0
    %85 = vmatprep.subr.mxu0 0.0
    %86 = vmatpush1.msra.mxu0 0.0
    %87 = vmatprep.subr.mxu0 0.0
    %88 = vmatpush1.msra.mxu0 0.0
    %89 = vmatprep.subr.mxu0 0.0
    %90 = vmatpush1.msra.mxu0 0.0
    %91 = vmatprep.subr.mxu0 0.0
    %92 = vmatpush1.msra.mxu0 0.0
    %93 = vmatprep.subr.mxu0 0.0
    %94 = vmatpush1.msra.mxu0 0.0
    %95 = vmatprep.subr.mxu0 0.0
    %96 = vmatpush1.msra.mxu0 0.0
    %97 = vmatprep.subr.mxu0 0.0
    %98 = vmatpush1.msra.mxu0 0.0
    %99 = vmatprep.subr.mxu0 0.0
    %100 = vmatpush1.msra.mxu0 0.0
    %101 = vmatprep.subr.mxu0 0.0
    %102 = vmatpush1.msra.mxu0 0.0
    %103 = vmatprep.subr.mxu0 0.0
    %104 = vmatpush1.msra.mxu0 0.0
    %105 = vmatprep.subr.mxu0 0.0
    %106 = vmatpush1.msra.mxu0 0.0
    %107 = vmatprep.subr.mxu0 0.0
    %108 = vmatpush1.msra.mxu0 0.0
    %109 = vmatprep.subr.mxu0 0.0
    %110 = vmatpush1.msra.mxu0 0.0
    %111 = vmatprep.subr.mxu0 0.0
    %112 = vmatpush1.msra.mxu0 0.0
    %113 = vmatprep.subr.mxu0 0.0
    %114 = vmatpush1.msra.mxu0 0.0
    %115 = vmatprep.subr.mxu0 0.0
    %116 = vmatpush1.msra.mxu0 0.0
    %117 = vmatprep.subr.mxu0 0.0
    %118 = vmatpush1.msra.mxu0 0.0
    %119 = vmatprep.subr.mxu0 0.0
    %120 = vmatpush1.msra.mxu0 0.0
    %121 = vmatprep.subr.mxu0 0.0
    %122 = vmatpush1.msra.mxu0 0.0
    %123 = vmatprep.subr.mxu0 0.0
    %124 = vmatpush1.msra.mxu0 0.0
    %125 = vmatprep.mubr.f32.mxu0 0.0
    %126 = vmatmul.mubr.f32.gmra.mrb[0].mxu0 %v56
    %v127 = vpop.f32.mrb[0].mxu0
    %v128 = vadd.f32 0.0, %v127
    %v129 = vpop.f32.mrb[0].mxu0
    %130 = vmatprep.mubr.f32.mxu0 0.0
    %131 = vmatmul.mubr.f32.gmra.mrb[0].mxu0 %v59
    %v132 = vpop.f32.mrb[0].mxu0
    %v133 = vadd.f32 0.0, %v132
    %v134 = vpop.f32.mrb[0].mxu0
    %135 = vdwg.mxu0
    %v136 = vadd.f32 %v46, %v128
    %v137 = vadd.f32 %v47, %v133
    %138 = vst [vmem:[#allocation2] sm:$0xff] %v136
    %139 = vst [vmem:[#allocation2 + $0x8] sm:$0xff] %v137
    // Predicated region
    $region22: #{tpu_custom_call.1} parent=1 // pred_check
      %p140 = pneg %p40
    $region23: #{tpu_custom_call.1} parent=1 // pred_check_branch
      %142 = sbr.rel (%p140) target = $region25
    $region24: #{tpu_custom_call.1} parent=1 // pred_region
      %v143 = vld [vmem:[#allocation2] sm:$0xff]
      %v144 = vld [vmem:[#allocation2 + $0x8] sm:$0xff]
      %145 = vst [vmem:[#allocation8] sm:$0xff] %v143
      %146 = vst [vmem:[#allocation8 + $0x8] sm:$0xff] %v144
    $region25: #{tpu_custom_call.1} parent=1 // pred_fallthru
      _
    // Predicated region
    $region26: #{tpu_custom_call.1} parent=1 // pred_check
      _
    $region27: #{tpu_custom_call.1} parent=1 // pred_check_branch
      %148 = sbr.rel (0) target = $region29
    $region28: #{tpu_custom_call.1} parent=1 // pred_region
      %s150 = ssub.s32 256, 256
      %151 = vsyncadd [#allocation5], %s150
      %s152 = sshll.u32 [#allocation8], 4
      %s153 = int_to_ptr.vmem [resolvable:$true] %s152
      %158 = dma.vmem_to_hbm [thread:$0]  %s153, 256, %s2, [#allocation5], 128, 128, 8
    $region29: #{tpu_custom_call.1} parent=1 // pred_fallthru
      _
    // Predicated region
    $region30: #{tpu_custom_call.1} parent=1 // pred_check
      _
    $region31: #{tpu_custom_call.1} parent=1 // pred_check_branch
      %160 = sbr.rel (0) target = $region33
    $region32: #{tpu_custom_call.1} parent=1 // pred_region
      %161 = dma.done [#allocation5], 256
    $region33: #{tpu_custom_call.1} parent=1 // pred_fallthru
      _
    %162 = vsyncpa [#allocation4], 1
    %163 = vsyncpa [#allocation7], 1
    %164 = vsyncpa [#allocation5], 1

</llo_original>
